<compile_context>
chip_gen: v5e
topology: v5e:2x2
jax: 0.10.0
libtpu: 0.0.40
codegen_flags: <defaults>
</compile_context>

<pallas_src>
import functools

import jax
import jax.numpy as jnp
from jax.experimental import pallas as pl
from jax.experimental.pallas import tpu as pltpu


# ---------------------------------------------------------------------------
# Small shape helpers (all static Python)
# ---------------------------------------------------------------------------
def _cdiv(a, b):
    return (a + b - 1) // b


def _round_up(x, m):
    return _cdiv(x, m) * m


def _pad2d(a, shape):
    return jnp.pad(a, [(0, t - s) for s, t in zip(a.shape, shape)])


def _pad_feat(d):
    # 128 fills v5e's 128x128 MXUs; wider layers get 256-aligned operands so
    # v6e/v7x's 256x256 MXUs are filled instead of running quarter-occupied.
    return _round_up(d, 128) if d <= 128 else _round_up(d, 256)


_MAX_TM = 512  # large row tiles amortize the ~0.35us/step overhead (v5e/v6e)


def _choose_row_tiling(n):
    """Return (tm, steps): tm multiple of 8, steps EVEN (balanced on v7x's
    2 TensorCores) unless the whole problem fits one tiny tile."""
    n8 = _round_up(n, 8)
    if n8 <= 8:
        return n8, 1
    steps = 2 * max(1, _cdiv(n8, 2 * _MAX_TM))
    tm = _round_up(_cdiv(n8, steps), 8)
    return tm, steps


# ---------------------------------------------------------------------------
# One-time parameter packing: BN fold + padding + bf16 cast (outside the jit)
# ---------------------------------------------------------------------------
def pack_mlp_params(params, is_bns=True, eps=1e-5):
    """Fold eval-mode BatchNorm into the following Linear, zero-pad hidden
    feature dims, cast weights to bf16.  Returns (packed_pytree, flops_per_row).

    BN fold:  y = h*scale + shift ;  y @ W + b == h @ (scale[:,None]*W)
                                                   + (shift @ W + b)
    """
    lins = params["lins"]
    num_layers = len(lins)
    use_bn = bool(is_bns) and num_layers > 1

    ws = [jnp.asarray(w, jnp.float32) for (w, _) in lins]
    bs = [jnp.asarray(b, jnp.float32).reshape(1, -1) for (_, b) in lins]

    if use_bn:
        for i in range(num_layers - 1):
            gamma, beta, mean, var = [
                jnp.asarray(a, jnp.float32).reshape(1, -1)
                for a in params["bns"][i]
            ]
            scale = gamma / jnp.sqrt(var + eps)
            shift = beta - mean * scale
            w_next = ws[i + 1]
            bs[i + 1] = bs[i + 1] + shift @ w_next          # uses original W
            ws[i + 1] = w_next * scale.reshape(-1, 1)       # scale rows of W

    in_c = ws[0].shape[0]
    out_c = ws[-1].shape[1]
    # Input / output feature dims stay UNPADDED (Mosaic lane-pads in vregs for
    # free); hidden dims are padded once so resident MXU operands are aligned.
    dims = [in_c] + [_pad_feat(w.shape[1]) for w in ws[:-1]] + [out_c]

    packed_w, packed_b = [], []
    flops_per_row = 0
    for i, (w, b) in enumerate(zip(ws, bs)):
        flops_per_row += 2 * int(w.shape[0]) * int(w.shape[1])   # true dims
        kp, mp = dims[i], dims[i + 1]
        packed_w.append(_pad2d(w, (kp, mp)).astype(jnp.bfloat16))
        packed_b.append(_pad2d(b, (1, mp)))                      # f32 bias
    packed = {"w": tuple(packed_w), "b": tuple(packed_b)}
    return packed, flops_per_row


# ---------------------------------------------------------------------------
# Fused MLP kernel (whole forward pass in one pallas_call)
# ---------------------------------------------------------------------------
def _make_fused_mlp_kernel(num_layers):
    """Ref order: x, then (w, b) per layer, then the output ref."""

    def kernel(*refs):
        x_ref, o_ref = refs[0], refs[-1]
        h = x_ref[...].astype(jnp.bfloat16)           # cast in-kernel (no XLA pass)
        acc = None
        for li in range(num_layers):
            w_ref = refs[1 + 2 * li]
            b_ref = refs[2 + 2 * li]
            acc = jnp.dot(h, w_ref[...], preferred_element_type=jnp.float32)
            acc = acc + b_ref[...]                    # f32 bias add
            if li < num_layers - 1:
                acc = jnp.maximum(acc, 0.0)           # ReLU (BN already folded)
                h = acc.astype(jnp.bfloat16)
        o_ref[...] = acc.astype(o_ref.dtype)

    return kernel


@functools.partial(jax.jit, static_argnames=("flops_per_row",))
def mlp_forward(packed, x, *, flops_per_row=0):
    """Eval-mode forward pass of the MLP as ONE fused Pallas kernel."""
    ws, bs = packed["w"], packed["b"]
    num_layers = len(ws)
    n, in_c = x.shape
    out_c = ws[-1].shape[1]          # last dim left unpadded in packing

    tm, steps = _choose_row_tiling(n)
    n_pad = tm * steps
    if n_pad != n:                   # only the ROW dim is padded (cheap)
        x = jnp.pad(x, ((0, n_pad - n), (0, 0)))

    inputs = [x]
    in_specs = [pl.BlockSpec((tm, in_c), lambda i: (i, 0))]
    for w, b in zip(ws, bs):
        inputs += [w, b]
        # Constant index_map => VMEM-resident across the whole grid.
        in_specs += [pl.BlockSpec(w.shape, lambda i: (0, 0)),
                     pl.BlockSpec(b.shape, lambda i: (0, 0))]

    bytes_accessed = int(
        n * in_c * 4 + n * out_c * 4
        + sum(int(a.size) * jnp.dtype(a.dtype).itemsize for a in inputs[1:]))

    out = pl.pallas_call(
        _make_fused_mlp_kernel(num_layers),
        out_shape=jax.ShapeDtypeStruct((n_pad, out_c), jnp.float32),
        grid_spec=pltpu.PrefetchScalarGridSpec(
            num_scalar_prefetch=0,
            grid=(steps,),
            in_specs=in_specs,
            out_specs=pl.BlockSpec((tm, out_c), lambda i: (i, 0)),
        ),
        compiler_params=pltpu.CompilerParams(
            dimension_semantics=("parallel",),
            vmem_limit_bytes=32 * 1024 * 1024,
        ),
        cost_estimate=pl.CostEstimate(
            flops=int(flops_per_row) * n,     # TRUE (unpadded) dims
            transcendentals=0,
            bytes_accessed=bytes_accessed),
    )(*inputs)

    if n_pad != n:
        out = out[:n]                # trivial row slice; columns already exact
    return out


# ---------------------------------------------------------------------------
# MLP parameter construction + pure-JAX reference (glue / correctness check)
# ---------------------------------------------------------------------------
def init_mlp_params(key, in_channels, hidden_channels, out_channels,
                    num_layers, is_bns=True):
    """Deterministic parameter init mirroring the PyTorch module's shapes."""
    dims = []
    if num_layers == 1:
        dims.append((in_channels, out_channels))
    else:
        dims.append((in_channels, hidden_channels))
        for _ in range(num_layers - 2):
            dims.append((hidden_channels, hidden_channels))
        dims.append((hidden_channels, out_channels))

    params = {"lins": [], "bns": []}
    for (fan_in, fan_out) in dims:
        key, kw, kb = jax.random.split(key, 3)
        bound = 1.0 / jnp.sqrt(fan_in)
        # PyTorch Linear stores weight as (out, in); we keep (in, out) so the
        # kernel computes x @ W, numerically identical to x @ weight.T.
        w = jax.random.uniform(kw, (fan_in, fan_out), jnp.float32, -bound, bound)
        b = jax.random.uniform(kb, (1, fan_out), jnp.float32, -bound, bound)
        params["lins"].append((w, b))

    if is_bns and num_layers > 1:
        for (_, fan_out) in dims[:-1]:
            key, kg, kb2, km, kv = jax.random.split(key, 5)
            gamma = jax.random.uniform(kg, (1, fan_out), jnp.float32, 0.5, 1.5)
            beta = jax.random.uniform(kb2, (1, fan_out), jnp.float32, -0.5, 0.5)
            running_mean = jax.random.uniform(km, (1, fan_out), jnp.float32, -0.5, 0.5)
            running_var = jax.random.uniform(kv, (1, fan_out), jnp.float32, 0.5, 1.5)
            params["bns"].append((gamma, beta, running_mean, running_var))
    return params


def mlp_reference(params, x, is_bns=True, eps=1e-5):
    """Pure-JAX f32 reference (eval-mode PyTorch semantics)."""
    n_layers = len(params["lins"])
    for i in range(n_layers - 1):
        w, b = params["lins"][i]
        x = jnp.maximum(x @ w + b, 0.0)
        if is_bns:
            gamma, beta, mean, var = params["bns"][i]
            x = gamma * (x - mean) / jnp.sqrt(var + eps) + beta
    w, b = params["lins"][-1]
    return x @ w + b


# ---------------------------------------------------------------------------
if __name__ == "__main__":
    key = jax.random.PRNGKey(0)

    # Small shapes consistent with the module: N nodes, feature MLP.
    # N=600 exercises row padding (-> 608) and an even 2-step parallel grid
    # (TM=304), so v7x's two TensorCores each get one tile.
    N, IN_C, HID_C, OUT_C, NUM_LAYERS = 600, 16, 32, 8, 3

    k_params, k_x = jax.random.split(key)
    params = init_mlp_params(k_params, IN_C, HID_C, OUT_C, NUM_LAYERS,
                             is_bns=True)
    x = jax.random.normal(k_x, (N, IN_C), jnp.float32)

    # One-time packing (BN fold + padding + bf16 cast) outside the per-call jit.
    packed, flops_per_row = pack_mlp_params(params, is_bns=True)

    out = mlp_forward(packed, x, flops_per_row=flops_per_row)
    out = jax.block_until_ready(out)

    ref = mlp_reference(params, x, is_bns=True)
    assert out.shape == (N, OUT_C)

    # bf16 matmul operands with f32 accumulation -> small relative error vs the
    # pure-f32 reference; use a relative-error metric (review feedback) plus a
    # loose elementwise check.
    rel_err = jnp.linalg.norm(out - ref) / jnp.linalg.norm(ref)
    assert float(rel_err) < 2e-2, f"relative error too large: {float(rel_err)}"
    assert jnp.allclose(out, ref, atol=1e-1, rtol=1e-1)

    print("KERNEL_OK")
</pallas_src>

<mosaic_0001>
module attributes {stable_mosaic.version = 11 : i64} {
  func.func @kernel(%arg0: i32, %arg1: memref<304x16xf32, #tpu.memory_space<vmem>>, %arg2: memref<16x128xbf16, #tpu.memory_space<vmem>>, %arg3: memref<1x128xf32, #tpu.memory_space<vmem>>, %arg4: memref<128x128xbf16, #tpu.memory_space<vmem>>, %arg5: memref<1x128xf32, #tpu.memory_space<vmem>>, %arg6: memref<128x8xbf16, #tpu.memory_space<vmem>>, %arg7: memref<1x8xf32, #tpu.memory_space<vmem>>, %arg8: memref<304x8xf32, #tpu.memory_space<vmem>>) attributes {dimension_semantics = [#tpu.dimension_semantics<parallel>], iteration_bounds = array<i64: 2>, scalar_prefetch = 0 : i64, scratch_operands = 0 : i64, tpu.core_type = #tpu.core_type<tc>, window_params = [{transform_indices = @transform_0, window_bounds = array<i64: 304, 16>}, {pipeline_mode = #tpu.pipeline_mode<synchronous>, transform_indices = @transform_1, window_bounds = array<i64: 16, 128>}, {pipeline_mode = #tpu.pipeline_mode<synchronous>, transform_indices = @transform_2, window_bounds = array<i64: 1, 128>}, {pipeline_mode = #tpu.pipeline_mode<synchronous>, transform_indices = @transform_3, window_bounds = array<i64: 128, 128>}, {pipeline_mode = #tpu.pipeline_mode<synchronous>, transform_indices = @transform_4, window_bounds = array<i64: 1, 128>}, {pipeline_mode = #tpu.pipeline_mode<synchronous>, transform_indices = @transform_5, window_bounds = array<i64: 128, 8>}, {pipeline_mode = #tpu.pipeline_mode<synchronous>, transform_indices = @transform_6, window_bounds = array<i64: 1, 8>}, {transform_indices = @transform_7, window_bounds = array<i64: 304, 8>}]} {
    %c0 = arith.constant 0 : index
    %c0_0 = arith.constant 0 : index
    %0 = vector.load %arg1[%c0, %c0_0] : memref<304x16xf32, #tpu.memory_space<vmem>>, vector<304x16xf32>
    %1 = arith.truncf %0 : vector<304x16xf32> to vector<304x16xbf16>
    %c0_1 = arith.constant 0 : index
    %c0_2 = arith.constant 0 : index
    %2 = vector.load %arg2[%c0_1, %c0_2] : memref<16x128xbf16, #tpu.memory_space<vmem>>, vector<16x128xbf16>
    %cst = arith.constant dense<0.000000e+00> : vector<304x128xf32>
    %3 = tpu.matmul %1, %2, %cst {dimension_numbers = #tpu.dot_dimension_numbers<[1], [0], [0], [1], [0, 0, 1, 1], [], []>} : vector<304x16xbf16>, vector<16x128xbf16>, vector<304x128xf32> -> vector<304x128xf32>
    %c0_3 = arith.constant 0 : index
    %c0_4 = arith.constant 0 : index
    %4 = vector.load %arg3[%c0_3, %c0_4] : memref<1x128xf32, #tpu.memory_space<vmem>>, vector<1x128xf32>
    %5 = vector.broadcast %4 : vector<1x128xf32> to vector<304x128xf32>
    %6 = arith.addf %3, %5 : vector<304x128xf32>
    %cst_5 = arith.constant 0.000000e+00 : f32
    %7 = vector.broadcast %cst_5 : f32 to vector<304x128xf32>
    %8 = arith.maximumf %6, %7 : vector<304x128xf32>
    %9 = arith.truncf %8 : vector<304x128xf32> to vector<304x128xbf16>
    %c0_6 = arith.constant 0 : index
    %c0_7 = arith.constant 0 : index
    %10 = vector.load %arg4[%c0_6, %c0_7] : memref<128x128xbf16, #tpu.memory_space<vmem>>, vector<128x128xbf16>
    %cst_8 = arith.constant dense<0.000000e+00> : vector<304x128xf32>
    %11 = tpu.matmul %9, %10, %cst_8 {dimension_numbers = #tpu.dot_dimension_numbers<[1], [0], [0], [1], [0, 0, 1, 1], [], []>} : vector<304x128xbf16>, vector<128x128xbf16>, vector<304x128xf32> -> vector<304x128xf32>
    %c0_9 = arith.constant 0 : index
    %c0_10 = arith.constant 0 : index
    %12 = vector.load %arg5[%c0_9, %c0_10] : memref<1x128xf32, #tpu.memory_space<vmem>>, vector<1x128xf32>
    %13 = vector.broadcast %12 : vector<1x128xf32> to vector<304x128xf32>
    %14 = arith.addf %11, %13 : vector<304x128xf32>
    %cst_11 = arith.constant 0.000000e+00 : f32
    %15 = vector.broadcast %cst_11 : f32 to vector<304x128xf32>
    %16 = arith.maximumf %14, %15 : vector<304x128xf32>
    %17 = arith.truncf %16 : vector<304x128xf32> to vector<304x128xbf16>
    %c0_12 = arith.constant 0 : index
    %c0_13 = arith.constant 0 : index
    %18 = vector.load %arg6[%c0_12, %c0_13] : memref<128x8xbf16, #tpu.memory_space<vmem>>, vector<128x8xbf16>
    %cst_14 = arith.constant dense<0.000000e+00> : vector<304x8xf32>
    %19 = tpu.matmul %17, %18, %cst_14 {dimension_numbers = #tpu.dot_dimension_numbers<[1], [0], [0], [1], [0, 0, 1, 1], [], []>} : vector<304x128xbf16>, vector<128x8xbf16>, vector<304x8xf32> -> vector<304x8xf32>
    %c0_15 = arith.constant 0 : index
    %c0_16 = arith.constant 0 : index
    %20 = vector.load %arg7[%c0_15, %c0_16] : memref<1x8xf32, #tpu.memory_space<vmem>>, vector<1x8xf32>
    %21 = vector.broadcast %20 : vector<1x8xf32> to vector<304x8xf32>
    %22 = arith.addf %19, %21 : vector<304x8xf32>
    %c0_17 = arith.constant 0 : index
    %c0_18 = arith.constant 0 : index
    %23 = vector.load %arg8[%c0_17, %c0_18] : memref<304x8xf32, #tpu.memory_space<vmem>>, vector<304x8xf32>
    tpu.vector_store %arg8[%c0_17, %c0_18], %22 {strides = array<i32>} : memref<304x8xf32, #tpu.memory_space<vmem>>, vector<304x8xf32>,
    return
  }
  func.func @transform_0(%arg0: i32) -> (i32, i32) {
    %c0_i32 = arith.constant 0 : i32
    %c0_i32_0 = arith.constant 0 : i32
    return %arg0, %c0_i32 : i32, i32
  }
  func.func @transform_1(%arg0: i32) -> (i32, i32) {
    %c0_i32 = arith.constant 0 : i32
    %c0_i32_0 = arith.constant 0 : i32
    %c0_i32_1 = arith.constant 0 : i32
    return %c0_i32, %c0_i32_0 : i32, i32
  }
  func.func @transform_2(%arg0: i32) -> (i32, i32) {
    %c0_i32 = arith.constant 0 : i32
    %c0_i32_0 = arith.constant 0 : i32
    %c0_i32_1 = arith.constant 0 : i32
    return %c0_i32, %c0_i32_0 : i32, i32
  }
  func.func @transform_3(%arg0: i32) -> (i32, i32) {
    %c0_i32 = arith.constant 0 : i32
    %c0_i32_0 = arith.constant 0 : i32
    %c0_i32_1 = arith.constant 0 : i32
    return %c0_i32, %c0_i32_0 : i32, i32
  }
  func.func @transform_4(%arg0: i32) -> (i32, i32) {
    %c0_i32 = arith.constant 0 : i32
    %c0_i32_0 = arith.constant 0 : i32
    %c0_i32_1 = arith.constant 0 : i32
    return %c0_i32, %c0_i32_0 : i32, i32
  }
  func.func @transform_5(%arg0: i32) -> (i32, i32) {
    %c0_i32 = arith.constant 0 : i32
    %c0_i32_0 = arith.constant 0 : i32
    %c0_i32_1 = arith.constant 0 : i32
    return %c0_i32, %c0_i32_0 : i32, i32
  }
  func.func @transform_6(%arg0: i32) -> (i32, i32) {
    %c0_i32 = arith.constant 0 : i32
    %c0_i32_0 = arith.constant 0 : i32
    %c0_i32_1 = arith.constant 0 : i32
    return %c0_i32, %c0_i32_0 : i32, i32
  }
  func.func @transform_7(%arg0: i32) -> (i32, i32) {
    %c0_i32 = arith.constant 0 : i32
    %c0_i32_0 = arith.constant 0 : i32
    return %arg0, %c0_i32 : i32, i32
  }
}

</mosaic_0001>

<llo_original>
// kernel: mlp_forward.1
$region0: #{mlp_forward.1}
  #allocation0 [shape = 'u32[]', space=smem, size = 0x4, offset = 0x4, fixed_abs, tag = 'smem constant byte address 0x4 - core index']
  #allocation1 [shape = 'u32[72,128]{1,0:T(1,128)}', space=vmem, size = 0x9000, scoped, tag = 'internal scratch']
  %s0 = inlined_call_operand.vmem [shape: f32[608,16], index: 0, kind: input, shape index: {}]
  %s1 = inlined_call_operand.vmem [shape: bf16[16,128], index: 1, kind: input, shape index: {}]
  %s2 = inlined_call_operand.vmem [shape: f32[1,128], index: 2, kind: input, shape index: {}]
  %s3 = inlined_call_operand.vmem [shape: bf16[128,128], index: 3, kind: input, shape index: {}]
  %s4 = inlined_call_operand.vmem [shape: f32[1,128], index: 4, kind: input, shape index: {}]
  %s5 = inlined_call_operand.vmem [shape: bf16[128,8], index: 5, kind: input, shape index: {}]
  %s6 = inlined_call_operand.vmem [shape: f32[1,8], index: 6, kind: input, shape index: {}]
  %s7 = inlined_call_operand.vmem [shape: f32[608,8], index: 7, kind: output, shape index: {}]
  %s8 = sld [smem:[#allocation0]]
  $region61: #{mlp_forward.1} parent=0
    _
  %s10 = ssub.s32 1, %s8
  %s11 = scalar_select 0, %s10, %s8
  loop: start=0, step=1, limit=4
  $region2: #{mlp_forward.1} parent=0 // loop_pre_header
    _
  $region3: #{mlp_forward.1} parent=0 // loop_header
    %s13 = sphi 0, %s17
    %p14 = scmp.ge.s32.totalorder %s13, 4
    %s23 = sphi 0, %s25
    %s26 = sphi 0, %s23
    %s27 = sphi 0, %s26
    %s43 = sphi 0, %s27
    %s47 = sphi 0, %s47
    %s49 = sphi 0, %s47
    %s50 = sphi 0, %s49
    %s64 = sphi 0, %s50
    %s68 = sphi 0, %s68
    %s70 = sphi 0, %s68
    %s71 = sphi 0, %s70
    %s85 = sphi 0, %s71
    %s89 = sphi 0, %s89
    %s91 = sphi 0, %s89
    %s92 = sphi 0, %s91
    %s106 = sphi 0, %s92
    %s110 = sphi 0, %s110
    %s112 = sphi 0, %s110
    %s113 = sphi 0, %s112
    %s127 = sphi 0, %s113
    %s131 = sphi 0, %s131
    %s133 = sphi 0, %s131
    %s134 = sphi 0, %s133
    %s148 = sphi 0, %s134
    %s152 = sphi 0, %s152
    %s154 = sphi 0, %s152
    %s155 = sphi 0, %s154
    %s169 = sphi 0, %s155
    %s175 = sphi 0, %s177
    %s178 = sphi 0, %s175
    %s179 = sphi 0, %s178
    %s195 = sphi 0, %s179
  $region4: #{mlp_forward.1} parent=0 // loop_header_branch
    %16 = sbr.rel (%p14) target = $region8
  $region5: #{mlp_forward.1} parent=0 // loop_body
    %s18 = ssub.s32 %s13, 1
    %s19 = ssub.s32 %s13, 2
    %s20 = sadd.s32 %s13, 1
    %s21 = ssub.s32 %s13, %s20
    %p22 = scmp.eq.s32.totalorder %s21, 0
    %s24 = sadd.s32 %s23, 1
    %s25 = scalar_select %p22, %s23, %s24
    %p28 = pneg %p22
    %p29 = scmp.eq.s32.totalorder %s13, 1
    %p30 = por %p28, %p29
    %p31 = scmp.ne.s32.totalorder %s23, %s26
    %p32 = scmp.eq.s32.totalorder %s13, 0
    %p33 = por %p31, %p32
    %p34 = scmp.ne.s32.totalorder %s23, %s26
    %p35 = scmp.eq.s32.totalorder %s18, 1
    %p36 = por %p34, %p35
    %p37 = scmp.ne.s32.totalorder %s26, %s27
    %p38 = scmp.eq.s32.totalorder %s18, 0
    %p39 = por %p37, %p38
    %p40 = scmp.ne.s32.totalorder %s26, %s27
    %p41 = scmp.eq.s32.totalorder %s19, 1
    %p42 = por %p40, %p41
    %p44 = scmp.ne.s32.totalorder %s27, %s43
    %p45 = scmp.eq.s32.totalorder %s19, 0
    %p46 = por %p44, %p45
    %s48 = sadd.s32 %s47, 1
    %p51 = scmp.eq.s32.totalorder %s13, 1
    %p52 = scmp.ne.s32.totalorder %s47, %s49
    %p53 = scmp.eq.s32.totalorder %s13, 0
    %p54 = por %p52, %p53
    %p55 = scmp.ne.s32.totalorder %s47, %s49
    %p56 = scmp.eq.s32.totalorder %s18, 1
    %p57 = por %p55, %p56
    %p58 = scmp.ne.s32.totalorder %s49, %s50
    %p59 = scmp.eq.s32.totalorder %s18, 0
    %p60 = por %p58, %p59
    %p61 = scmp.ne.s32.totalorder %s49, %s50
    %p62 = scmp.eq.s32.totalorder %s19, 1
    %p63 = por %p61, %p62
    %p65 = scmp.ne.s32.totalorder %s50, %s64
    %p66 = scmp.eq.s32.totalorder %s19, 0
    %p67 = por %p65, %p66
    %s69 = sadd.s32 %s68, 1
    %p72 = scmp.eq.s32.totalorder %s13, 1
    %p73 = scmp.ne.s32.totalorder %s68, %s70
    %p74 = scmp.eq.s32.totalorder %s13, 0
    %p75 = por %p73, %p74
    %p76 = scmp.ne.s32.totalorder %s68, %s70
    %p77 = scmp.eq.s32.totalorder %s18, 1
    %p78 = por %p76, %p77
    %p79 = scmp.ne.s32.totalorder %s70, %s71
    %p80 = scmp.eq.s32.totalorder %s18, 0
    %p81 = por %p79, %p80
    %p82 = scmp.ne.s32.totalorder %s70, %s71
    %p83 = scmp.eq.s32.totalorder %s19, 1
    %p84 = por %p82, %p83
    %p86 = scmp.ne.s32.totalorder %s71, %s85
    %p87 = scmp.eq.s32.totalorder %s19, 0
    %p88 = por %p86, %p87
    %s90 = sadd.s32 %s89, 1
    %p93 = scmp.eq.s32.totalorder %s13, 1
    %p94 = scmp.ne.s32.totalorder %s89, %s91
    %p95 = scmp.eq.s32.totalorder %s13, 0
    %p96 = por %p94, %p95
    %p97 = scmp.ne.s32.totalorder %s89, %s91
    %p98 = scmp.eq.s32.totalorder %s18, 1
    %p99 = por %p97, %p98
    %p100 = scmp.ne.s32.totalorder %s91, %s92
    %p101 = scmp.eq.s32.totalorder %s18, 0
    %p102 = por %p100, %p101
    %p103 = scmp.ne.s32.totalorder %s91, %s92
    %p104 = scmp.eq.s32.totalorder %s19, 1
    %p105 = por %p103, %p104
    %p107 = scmp.ne.s32.totalorder %s92, %s106
    %p108 = scmp.eq.s32.totalorder %s19, 0
    %p109 = por %p107, %p108
    %s111 = sadd.s32 %s110, 1
    %p114 = scmp.eq.s32.totalorder %s13, 1
    %p115 = scmp.ne.s32.totalorder %s110, %s112
    %p116 = scmp.eq.s32.totalorder %s13, 0
    %p117 = por %p115, %p116
    %p118 = scmp.ne.s32.totalorder %s110, %s112
    %p119 = scmp.eq.s32.totalorder %s18, 1
    %p120 = por %p118, %p119
    %p121 = scmp.ne.s32.totalorder %s112, %s113
    %p122 = scmp.eq.s32.totalorder %s18, 0
    %p123 = por %p121, %p122
    %p124 = scmp.ne.s32.totalorder %s112, %s113
    %p125 = scmp.eq.s32.totalorder %s19, 1
    %p126 = por %p124, %p125
    %p128 = scmp.ne.s32.totalorder %s113, %s127
    %p129 = scmp.eq.s32.totalorder %s19, 0
    %p130 = por %p128, %p129
    %s132 = sadd.s32 %s131, 1
    %p135 = scmp.eq.s32.totalorder %s13, 1
    %p136 = scmp.ne.s32.totalorder %s131, %s133
    %p137 = scmp.eq.s32.totalorder %s13, 0
    %p138 = por %p136, %p137
    %p139 = scmp.ne.s32.totalorder %s131, %s133
    %p140 = scmp.eq.s32.totalorder %s18, 1
    %p141 = por %p139, %p140
    %p142 = scmp.ne.s32.totalorder %s133, %s134
    %p143 = scmp.eq.s32.totalorder %s18, 0
    %p144 = por %p142, %p143
    %p145 = scmp.ne.s32.totalorder %s133, %s134
    %p146 = scmp.eq.s32.totalorder %s19, 1
    %p147 = por %p145, %p146
    %p149 = scmp.ne.s32.totalorder %s134, %s148
    %p150 = scmp.eq.s32.totalorder %s19, 0
    %p151 = por %p149, %p150
    %s153 = sadd.s32 %s152, 1
    %p156 = scmp.eq.s32.totalorder %s13, 1
    %p157 = scmp.ne.s32.totalorder %s152, %s154
    %p158 = scmp.eq.s32.totalorder %s13, 0
    %p159 = por %p157, %p158
    %p160 = scmp.ne.s32.totalorder %s152, %s154
    %p161 = scmp.eq.s32.totalorder %s18, 1
    %p162 = por %p160, %p161
    %p163 = scmp.ne.s32.totalorder %s154, %s155
    %p164 = scmp.eq.s32.totalorder %s18, 0
    %p165 = por %p163, %p164
    %p166 = scmp.ne.s32.totalorder %s154, %s155
    %p167 = scmp.eq.s32.totalorder %s19, 1
    %p168 = por %p166, %p167
    %p170 = scmp.ne.s32.totalorder %s155, %s169
    %p171 = scmp.eq.s32.totalorder %s19, 0
    %p172 = por %p170, %p171
    %s173 = ssub.s32 %s13, %s20
    %p174 = scmp.eq.s32.totalorder %s173, 0
    %s176 = sadd.s32 %s175, 1
    %s177 = scalar_select %p174, %s175, %s176
    %p180 = pneg %p174
    %p181 = scmp.eq.s32.totalorder %s13, 1
    %p182 = por %p180, %p181
    %p183 = scmp.ne.s32.totalorder %s175, %s178
    %p184 = scmp.eq.s32.totalorder %s13, 0
    %p185 = por %p183, %p184
    %p186 = scmp.ne.s32.totalorder %s175, %s178
    %p187 = scmp.eq.s32.totalorder %s18, 1
    %p188 = por %p186, %p187
    %p189 = scmp.ne.s32.totalorder %s178, %s179
    %p190 = scmp.eq.s32.totalorder %s18, 0
    %p191 = por %p189, %p190
    %p192 = scmp.ne.s32.totalorder %s178, %s179
    %p193 = scmp.eq.s32.totalorder %s19, 1
    %p194 = por %p192, %p193
    %p196 = scmp.ne.s32.totalorder %s179, %s195
    %p197 = scmp.eq.s32.totalorder %s19, 0
    %p198 = por %p196, %p197
    %p199 = scmp.le.s32.totalorder 1, %s13
    %p200 = scmp.lt.s32.totalorder %s13, 3
    %p201 = pnand %p199, %p200
    %p202 = pneg %p201
    // Predicated region
    $region9: #{mlp_forward.1} parent=5 // pred_check
      _
    $region10: #{mlp_forward.1} parent=5 // pred_check_branch
      %204 = sbr.rel (%p201) target = $region12
    $region11: #{mlp_forward.1} parent=5 // pred_region
      %s205 = ssub.s32 %s13, 1
      // Predicated region
      $region13: #{mlp_forward.1} parent=11 // pred_check
        %p206 = pneg %p60
      $region14: #{mlp_forward.1} parent=11 // pred_check_branch
        %208 = sbr.rel (%p206) target = $region16
      $region15: #{mlp_forward.1} parent=11 // pred_region
        _
      $region16: #{mlp_forward.1} parent=11 // pred_fallthru
        _
      // Predicated region
      $region17: #{mlp_forward.1} parent=11 // pred_check
        %p209 = pneg %p81
      $region18: #{mlp_forward.1} parent=11 // pred_check_branch
        %211 = sbr.rel (%p209) target = $region20
      $region19: #{mlp_forward.1} parent=11 // pred_region
        _
      $region20: #{mlp_forward.1} parent=11 // pred_fallthru
        _
      // Predicated region
      $region21: #{mlp_forward.1} parent=11 // pred_check
        %p212 = pneg %p102
      $region22: #{mlp_forward.1} parent=11 // pred_check_branch
        %214 = sbr.rel (%p212) target = $region24
      $region23: #{mlp_forward.1} parent=11 // pred_region
        _
      $region24: #{mlp_forward.1} parent=11 // pred_fallthru
        _
      // Predicated region
      $region25: #{mlp_forward.1} parent=11 // pred_check
        %p215 = pneg %p123
      $region26: #{mlp_forward.1} parent=11 // pred_check_branch
        %217 = sbr.rel (%p215) target = $region28
      $region27: #{mlp_forward.1} parent=11 // pred_region
        _
      $region28: #{mlp_forward.1} parent=11 // pred_fallthru
        _
      // Predicated region
      $region29: #{mlp_forward.1} parent=11 // pred_check
        %p218 = pneg %p144
      $region30: #{mlp_forward.1} parent=11 // pred_check_branch
        %220 = sbr.rel (%p218) target = $region32
      $region31: #{mlp_forward.1} parent=11 // pred_region
        _
      $region32: #{mlp_forward.1} parent=11 // pred_fallthru
        _
      // Predicated region
      $region33: #{mlp_forward.1} parent=11 // pred_check
        %p221 = pneg %p165
      $region34: #{mlp_forward.1} parent=11 // pred_check_branch
        %223 = sbr.rel (%p221) target = $region36
      $region35: #{mlp_forward.1} parent=11 // pred_region
        _
      $region36: #{mlp_forward.1} parent=11 // pred_fallthru
        _
    $region12: #{mlp_forward.1} parent=5 // pred_fallthru
      _
    %p224 = scmp.lt.s32.totalorder %s13, 2
    // Predicated region
    $region37: #{mlp_forward.1} parent=5 // pred_check
      %p225 = pneg %p224
    $region38: #{mlp_forward.1} parent=5 // pred_check_branch
      %227 = sbr.rel (%p225) target = $region40
    $region39: #{mlp_forward.1} parent=5 // pred_region
      // Predicated region
      $region41: #{mlp_forward.1} parent=39 // pred_check
        %p228 = pneg %p33
      $region42: #{mlp_forward.1} parent=39 // pred_check_branch
        %230 = sbr.rel (%p228) target = $region44
      $region43: #{mlp_forward.1} parent=39 // pred_region
        %s231 = smul.u32 38, %s13
        %p232 = scmp.lt.s32.totalorder %s231, 75
        %s233 = scalar_select %p232, %s231, 75
        %s234 = smul.addr %s233, 8
        %s235 = scalar_lea.vmem %s0, %s234
        %s236 = smul.u32 38, %s13
      $region44: #{mlp_forward.1} parent=39 // pred_fallthru
        _
    $region40: #{mlp_forward.1} parent=5 // pred_fallthru
      _
    %p237 = scmp.le.s32.totalorder 1, %s13
    %p238 = scmp.lt.s32.totalorder %s13, 3
    %p239 = pnand %p237, %p238
    %p240 = pneg %p239
    // Predicated region
    $region45: #{mlp_forward.1} parent=5 // pred_check
      _
    $region46: #{mlp_forward.1} parent=5 // pred_check_branch
      %242 = sbr.rel (%p239) target = $region48
    $region47: #{mlp_forward.1} parent=5 // pred_region
      %s243 = ssub.s32 %s13, 1
      %s244 = smul.u32 38, %s18
      %p245 = scmp.lt.s32.totalorder %s244, 75
      %s246 = scalar_select %p245, %s244, 75
      %s247 = smul.addr %s246, 8
      %s248 = scalar_lea.vmem %s0, %s247
      %p249 = pneg %p39
      %p250 = pneg %p36
      %p251 = pneg %p60
      %p252 = pneg %p57
      %p253 = pneg %p81
      %p254 = pneg %p78
      %p255 = pneg %p102
      %p256 = pneg %p99
      %p257 = pneg %p123
      %p258 = pneg %p120
      %p259 = pneg %p144
      %p260 = pneg %p141
      %p261 = pneg %p165
      %p262 = pneg %p162
      %p263 = pneg %p191
      %p264 = pneg %p188
      %s265 = smul.u32 38, %s18
      %p266 = scmp.lt.s32.totalorder %s265, 75
      %s267 = scalar_select %p266, %s265, 75
      %s268 = smul.addr %s267, 8
      %s269 = scalar_lea.vmem %s7, %s268
      %s270 = smul.u32 38, %s18
      %p271 = scmp.lt.s32.totalorder %s270, 75
      %s272 = scalar_select %p271, %s270, 75
      %s273 = smul.addr %s272, 8
      %s274 = scalar_lea.vmem %s0, %s273
      %s275 = smul.u32 38, %s18
      %s276 = smul.u32 38, %s18
      %p277 = scmp.lt.s32.totalorder %s276, 75
      %s278 = scalar_select %p277, %s276, 75
      %s279 = smul.addr %s278, 8
      %s280 = scalar_lea.vmem %s7, %s279
      %s281 = smul.u32 38, %s18
      %v283 = vld [vmem:[%s274] sm:$0xff]
      %v284 = vld [vmem:[%s274 + $0x8] sm:$0xff]
      %v285 = vld [vmem:[%s274 + $0x10] sm:$0xff]
      %v286 = vld [vmem:[%s274 + $0x18] sm:$0xff]
      %v287 = vld [vmem:[%s274 + $0x20] sm:$0xff]
      %v288 = vld [vmem:[%s274 + $0x28] sm:$0xff]
      %v289 = vld [vmem:[%s274 + $0x30] sm:$0xff]
      %v290 = vld [vmem:[%s274 + $0x38] sm:$0xff]
      %v291 = vld [vmem:[%s274 + $0x40] sm:$0xff]
      %v292 = vld [vmem:[%s274 + $0x48] sm:$0xff]
      %v293 = vld [vmem:[%s274 + $0x50] sm:$0xff]
      %v294 = vld [vmem:[%s274 + $0x58] sm:$0xff]
      %v295 = vld [vmem:[%s274 + $0x60] sm:$0xff]
      %v296 = vld [vmem:[%s274 + $0x68] sm:$0xff]
      %v297 = vld [vmem:[%s274 + $0x70] sm:$0xff]
      %v298 = vld [vmem:[%s274 + $0x78] sm:$0xff]
      %v299 = vld [vmem:[%s274 + $0x80] sm:$0xff]
      %v300 = vld [vmem:[%s274 + $0x88] sm:$0xff]
      %v301 = vld [vmem:[%s274 + $0x90] sm:$0xff]
      %v302 = vld [vmem:[%s274 + $0x98] sm:$0xff]
      %v303 = vld [vmem:[%s274 + $0xa0] sm:$0xff]
      %v304 = vld [vmem:[%s274 + $0xa8] sm:$0xff]
      %v305 = vld [vmem:[%s274 + $0xb0] sm:$0xff]
      %v306 = vld [vmem:[%s274 + $0xb8] sm:$0xff]
      %v307 = vld [vmem:[%s274 + $0xc0] sm:$0xff]
      %v308 = vld [vmem:[%s274 + $0xc8] sm:$0xff]
      %v309 = vld [vmem:[%s274 + $0xd0] sm:$0xff]
      %v310 = vld [vmem:[%s274 + $0xd8] sm:$0xff]
      %v311 = vld [vmem:[%s274 + $0xe0] sm:$0xff]
      %v312 = vld [vmem:[%s274 + $0xe8] sm:$0xff]
      %v313 = vld [vmem:[%s274 + $0xf0] sm:$0xff]
      %v314 = vld [vmem:[%s274 + $0xf8] sm:$0xff]
      %v315 = vld [vmem:[%s274 + $0x100] sm:$0xff]
      %v316 = vld [vmem:[%s274 + $0x108] sm:$0xff]
      %v317 = vld [vmem:[%s274 + $0x110] sm:$0xff]
      %v318 = vld [vmem:[%s274 + $0x118] sm:$0xff]
      %v319 = vld [vmem:[%s274 + $0x120] sm:$0xff]
      %v320 = vld [vmem:[%s274 + $0x128] sm:$0xff]
      %v321 = vpack.c.bf16 %v284, %v283
      %v322 = vpack.c.bf16 %v286, %v285
      %v323 = vpack.c.bf16 %v288, %v287
      %v324 = vpack.c.bf16 %v290, %v289
      %v325 = vpack.c.bf16 %v292, %v291
      %v326 = vpack.c.bf16 %v294, %v293
      %v327 = vpack.c.bf16 %v296, %v295
      %v328 = vpack.c.bf16 %v298, %v297
      %v329 = vpack.c.bf16 %v300, %v299
      %v330 = vpack.c.bf16 %v302, %v301
      %v331 = vpack.c.bf16 %v304, %v303
      %v332 = vpack.c.bf16 %v306, %v305
      %v333 = vpack.c.bf16 %v308, %v307
      %v334 = vpack.c.bf16 %v310, %v309
      %v335 = vpack.c.bf16 %v312, %v311
      %v336 = vpack.c.bf16 %v314, %v313
      %v337 = vpack.c.bf16 %v316, %v315
      %v338 = vpack.c.bf16 %v318, %v317
      %v339 = vpack.c.bf16 %v320, %v319
      %v340 = vld [vmem:[%s1] sm:$0xf]
      %v341 = vld [vmem:[%s1 + $0x4] sm:$0xf]
      %v342 = vld [vmem:[%s2] sm:$0x1]
      %v344 = vperm.slane %v342, 0
      %v348 = vunpack.c.l.b16 %v340
      %v349 = vunpack.c.l.b16 %v341
      %v350 = vpack.c.b16 %v349, %v348
      %vm352 = vcmask 130048
      %v354 = vsel %vm352, %v321, 0
      %v357 = vsel %vm352, %v322, 0
      %v360 = vsel %vm352, %v323, 0
      %v363 = vsel %vm352, %v324, 0
      %v366 = vsel %vm352, %v325, 0
      %v369 = vsel %vm352, %v326, 0
      %v372 = vsel %vm352, %v327, 0
      %v375 = vsel %vm352, %v328, 0
      %v378 = vsel %vm352, %v329, 0
      %v381 = vsel %vm352, %v330, 0
      %v384 = vsel %vm352, %v331, 0
      %v387 = vsel %vm352, %v332, 0
      %v390 = vsel %vm352, %v333, 0
      %v393 = vsel %vm352, %v334, 0
      %v396 = vsel %vm352, %v335, 0
      %v399 = vsel %vm352, %v336, 0
      %v402 = vsel %vm352, %v337, 0
      %v405 = vsel %vm352, %v338, 0
      %v408 = vsel %vm352, %v339, 0
      %410 = vmatpush.bf16.msra.mxu0 0
      %411 = vmatpush.bf16.msra.mxu0 0
      %412 = vmatpush.bf16.msra.mxu0 0
      %413 = vmatpush.bf16.msra.mxu0 0
      %414 = vmatpush.bf16.msra.mxu0 0
      %415 = vmatpush.bf16.msra.mxu0 0
      %416 = vmatpush.bf16.msra.mxu0 0
      %417 = vmatpush.bf16.msra.mxu0 %v350
      %418 = vmatmul.bf16.gmra.mxu0 %v354
      %v419 = vpop.f32.mrf.mxu0
      %v420 = vadd.f32 %v344, %v419
      %v421 = vpop.f32.mrf.mxu0
      %v422 = vadd.f32 %v344, %v421
      %423 = vmatmul.bf16.gmra.mxu0 %v357
      %v424 = vpop.f32.mrf.mxu0
      %v425 = vadd.f32 %v344, %v424
      %v426 = vpop.f32.mrf.mxu0
      %v427 = vadd.f32 %v344, %v426
      %428 = vmatmul.bf16.gmra.mxu0 %v360
      %v429 = vpop.f32.mrf.mxu0
      %v430 = vadd.f32 %v344, %v429
      %v431 = vpop.f32.mrf.mxu0
      %v432 = vadd.f32 %v344, %v431
      %433 = vmatmul.bf16.gmra.mxu0 %v363
      %v434 = vpop.f32.mrf.mxu0
      %v435 = vadd.f32 %v344, %v434
      %v436 = vpop.f32.mrf.mxu0
      %v437 = vadd.f32 %v344, %v436
      %438 = vmatmul.bf16.gmra.mxu0 %v366
      %v439 = vpop.f32.mrf.mxu0
      %v440 = vadd.f32 %v344, %v439
      %v441 = vpop.f32.mrf.mxu0
      %v442 = vadd.f32 %v344, %v441
      %443 = vmatmul.bf16.gmra.mxu0 %v369
      %v444 = vpop.f32.mrf.mxu0
      %v445 = vadd.f32 %v344, %v444
      %v446 = vpop.f32.mrf.mxu0
      %v447 = vadd.f32 %v344, %v446
      %448 = vmatmul.bf16.gmra.mxu0 %v372
      %v449 = vpop.f32.mrf.mxu0
      %v450 = vadd.f32 %v344, %v449
      %v451 = vpop.f32.mrf.mxu0
      %v452 = vadd.f32 %v344, %v451
      %453 = vmatmul.bf16.gmra.mxu0 %v375
      %v454 = vpop.f32.mrf.mxu0
      %v455 = vadd.f32 %v344, %v454
      %v456 = vpop.f32.mrf.mxu0
      %v457 = vadd.f32 %v344, %v456
      %458 = vmatmul.bf16.gmra.mxu0 %v378
      %v459 = vpop.f32.mrf.mxu0
      %v460 = vadd.f32 %v344, %v459
      %v461 = vpop.f32.mrf.mxu0
      %v462 = vadd.f32 %v344, %v461
      %463 = vmatmul.bf16.gmra.mxu0 %v381
      %v464 = vpop.f32.mrf.mxu0
      %v465 = vadd.f32 %v344, %v464
      %v466 = vpop.f32.mrf.mxu0
      %v467 = vadd.f32 %v344, %v466
      %468 = vmatmul.bf16.gmra.mxu0 %v384
      %v469 = vpop.f32.mrf.mxu0
      %v470 = vadd.f32 %v344, %v469
      %v471 = vpop.f32.mrf.mxu0
      %v472 = vadd.f32 %v344, %v471
      %473 = vmatmul.bf16.gmra.mxu0 %v387
      %v474 = vpop.f32.mrf.mxu0
      %v475 = vadd.f32 %v344, %v474
      %v476 = vpop.f32.mrf.mxu0
      %v477 = vadd.f32 %v344, %v476
      %478 = vmatmul.bf16.gmra.mxu0 %v390
      %v479 = vpop.f32.mrf.mxu0
      %v480 = vadd.f32 %v344, %v479
      %v481 = vpop.f32.mrf.mxu0
      %v482 = vadd.f32 %v344, %v481
      %483 = vmatmul.bf16.gmra.mxu0 %v393
      %v484 = vpop.f32.mrf.mxu0
      %v485 = vadd.f32 %v344, %v484
      %v486 = vpop.f32.mrf.mxu0
      %v487 = vadd.f32 %v344, %v486
      %488 = vmatmul.bf16.gmra.mxu0 %v396
      %v489 = vpop.f32.mrf.mxu0
      %v490 = vadd.f32 %v344, %v489
      %v491 = vpop.f32.mrf.mxu0
      %v492 = vadd.f32 %v344, %v491
      %493 = vmatmul.bf16.gmra.mxu0 %v399
      %v494 = vpop.f32.mrf.mxu0
      %v495 = vadd.f32 %v344, %v494
      %v496 = vpop.f32.mrf.mxu0
      %v497 = vadd.f32 %v344, %v496
      %498 = vmatmul.bf16.gmra.mxu0 %v402
      %v499 = vpop.f32.mrf.mxu0
      %v500 = vadd.f32 %v344, %v499
      %v501 = vpop.f32.mrf.mxu0
      %v502 = vadd.f32 %v344, %v501
      %503 = vmatmul.bf16.gmra.mxu0 %v405
      %v504 = vpop.f32.mrf.mxu0
      %v505 = vadd.f32 %v344, %v504
      %v506 = vpop.f32.mrf.mxu0
      %v507 = vadd.f32 %v344, %v506
      %508 = vmatmul.bf16.gmra.mxu0 %v408
      %v509 = vpop.f32.mrf.mxu0
      %v510 = vadd.f32 %v344, %v509
      %v511 = vpop.f32.mrf.mxu0
      %v512 = vadd.f32 %v344, %v511
      %513 = vdwg.mxu0
      %v514 = vmax.f32 %v420, 0.0
      %v515 = vmax.f32 %v422, 0.0
      %v516 = vmax.f32 %v425, 0.0
      %v517 = vmax.f32 %v427, 0.0
      %v518 = vmax.f32 %v430, 0.0
      %v519 = vmax.f32 %v432, 0.0
      %v520 = vmax.f32 %v435, 0.0
      %v521 = vmax.f32 %v437, 0.0
      %v522 = vmax.f32 %v440, 0.0
      %v523 = vmax.f32 %v442, 0.0
      %v524 = vmax.f32 %v445, 0.0
      %v525 = vmax.f32 %v447, 0.0
      %v526 = vmax.f32 %v450, 0.0
      %v527 = vmax.f32 %v452, 0.0
      %v528 = vmax.f32 %v455, 0.0
      %v529 = vmax.f32 %v457, 0.0
      %v530 = vmax.f32 %v460, 0.0
      %v531 = vmax.f32 %v462, 0.0
      %v532 = vmax.f32 %v465, 0.0
      %v533 = vmax.f32 %v467, 0.0
      %v534 = vmax.f32 %v470, 0.0
      %v535 = vmax.f32 %v472, 0.0
      %v536 = vmax.f32 %v475, 0.0
      %v537 = vmax.f32 %v477, 0.0
      %v538 = vmax.f32 %v480, 0.0
      %v539 = vmax.f32 %v482, 0.0
      %v540 = vmax.f32 %v485, 0.0
      %v541 = vmax.f32 %v487, 0.0
      %v542 = vmax.f32 %v490, 0.0
      %v543 = vmax.f32 %v492, 0.0
      %v544 = vmax.f32 %v495, 0.0
      %v545 = vmax.f32 %v497, 0.0
      %v546 = vmax.f32 %v500, 0.0
      %v547 = vmax.f32 %v502, 0.0
      %v548 = vmax.f32 %v505, 0.0
      %v549 = vmax.f32 %v507, 0.0
      %v550 = vmax.f32 %v510, 0.0
      %v551 = vmax.f32 %v512, 0.0
      %v552 = vpack.c.bf16 %v515, %v514
      %v553 = vpack.c.bf16 %v517, %v516
      %v554 = vpack.c.bf16 %v519, %v518
      %v555 = vpack.c.bf16 %v521, %v520
      %v556 = vpack.c.bf16 %v523, %v522
      %v557 = vpack.c.bf16 %v525, %v524
      %v558 = vpack.c.bf16 %v527, %v526
      %v559 = vpack.c.bf16 %v529, %v528
      %v560 = vpack.c.bf16 %v531, %v530
      %v561 = vpack.c.bf16 %v533, %v532
      %v562 = vpack.c.bf16 %v535, %v534
      %v563 = vpack.c.bf16 %v537, %v536
      %v564 = vpack.c.bf16 %v539, %v538
      %v565 = vpack.c.bf16 %v541, %v540
      %v566 = vpack.c.bf16 %v543, %v542
      %v567 = vpack.c.bf16 %v545, %v544
      %v568 = vpack.c.bf16 %v547, %v546
      %v569 = vpack.c.bf16 %v549, %v548
      %v570 = vpack.c.bf16 %v551, %v550
      %v571 = vld [vmem:[%s3] sm:$0xf]
      %v572 = vld [vmem:[%s3 + $0x4] sm:$0xf]
      %v573 = vld [vmem:[%s3 + $0x8] sm:$0xf]
      %v574 = vld [vmem:[%s3 + $0xc] sm:$0xf]
      %v575 = vld [vmem:[%s3 + $0x10] sm:$0xf]
      %v576 = vld [vmem:[%s3 + $0x14] sm:$0xf]
      %v577 = vld [vmem:[%s3 + $0x18] sm:$0xf]
      %v578 = vld [vmem:[%s3 + $0x1c] sm:$0xf]
      %v579 = vld [vmem:[%s3 + $0x20] sm:$0xf]
      %v580 = vld [vmem:[%s3 + $0x24] sm:$0xf]
      %v581 = vld [vmem:[%s3 + $0x28] sm:$0xf]
      %v582 = vld [vmem:[%s3 + $0x2c] sm:$0xf]
      %v583 = vld [vmem:[%s3 + $0x30] sm:$0xf]
      %v584 = vld [vmem:[%s3 + $0x34] sm:$0xf]
      %v585 = vld [vmem:[%s3 + $0x38] sm:$0xf]
      %v586 = vld [vmem:[%s3 + $0x3c] sm:$0xf]
      %v587 = vld [vmem:[%s4] sm:$0x1]
      %v589 = vperm.slane %v587, 0
      %v607 = vunpack.c.l.b16 %v571
      %v608 = vunpack.c.l.b16 %v572
      %v609 = vunpack.c.l.b16 %v573
      %v610 = vunpack.c.l.b16 %v574
      %v611 = vunpack.c.l.b16 %v575
      %v612 = vunpack.c.l.b16 %v576
      %v613 = vunpack.c.l.b16 %v577
      %v614 = vunpack.c.l.b16 %v578
      %v615 = vunpack.c.l.b16 %v579
      %v616 = vunpack.c.l.b16 %v580
      %v617 = vunpack.c.l.b16 %v581
      %v618 = vunpack.c.l.b16 %v582
      %v619 = vunpack.c.l.b16 %v583
      %v620 = vunpack.c.l.b16 %v584
      %v621 = vunpack.c.l.b16 %v585
      %v622 = vunpack.c.l.b16 %v586
      %v623 = vpack.c.b16 %v608, %v607
      %v624 = vpack.c.b16 %v610, %v609
      %v625 = vpack.c.b16 %v612, %v611
      %v626 = vpack.c.b16 %v614, %v613
      %v627 = vpack.c.b16 %v616, %v615
      %v628 = vpack.c.b16 %v618, %v617
      %v629 = vpack.c.b16 %v620, %v619
      %v630 = vpack.c.b16 %v622, %v621
      %639 = vmatpush.bf16.msra.mxu0 %v630
      %640 = vmatpush.bf16.msra.mxu0 %v629
      %641 = vmatpush.bf16.msra.mxu0 %v628
      %642 = vmatpush.bf16.msra.mxu0 %v627
      %643 = vmatpush.bf16.msra.mxu0 %v626
      %644 = vmatpush.bf16.msra.mxu0 %v625
      %645 = vmatpush.bf16.msra.mxu0 %v624
      %646 = vmatpush.bf16.msra.mxu0 %v623
      %647 = vmatmul.bf16.gmra.mxu0 %v552
      %v648 = vpop.f32.mrf.mxu0
      %v649 = vadd.f32 %v589, %v648
      %v650 = vpop.f32.mrf.mxu0
      %v651 = vadd.f32 %v589, %v650
      %652 = vmatmul.bf16.gmra.mxu0 %v553
      %v653 = vpop.f32.mrf.mxu0
      %v654 = vadd.f32 %v589, %v653
      %v655 = vpop.f32.mrf.mxu0
      %v656 = vadd.f32 %v589, %v655
      %657 = vmatmul.bf16.gmra.mxu0 %v554
      %v658 = vpop.f32.mrf.mxu0
      %v659 = vadd.f32 %v589, %v658
      %v660 = vpop.f32.mrf.mxu0
      %v661 = vadd.f32 %v589, %v660
      %662 = vmatmul.bf16.gmra.mxu0 %v555
      %v663 = vpop.f32.mrf.mxu0
      %v664 = vadd.f32 %v589, %v663
      %v665 = vpop.f32.mrf.mxu0
      %v666 = vadd.f32 %v589, %v665
      %667 = vmatmul.bf16.gmra.mxu0 %v556
      %v668 = vpop.f32.mrf.mxu0
      %v669 = vadd.f32 %v589, %v668
      %v670 = vpop.f32.mrf.mxu0
      %v671 = vadd.f32 %v589, %v670
      %672 = vmatmul.bf16.gmra.mxu0 %v557
      %v673 = vpop.f32.mrf.mxu0
      %v674 = vadd.f32 %v589, %v673
      %v675 = vpop.f32.mrf.mxu0
      %v676 = vadd.f32 %v589, %v675
      %677 = vmatmul.bf16.gmra.mxu0 %v558
      %v678 = vpop.f32.mrf.mxu0
      %v679 = vadd.f32 %v589, %v678
      %v680 = vpop.f32.mrf.mxu0
      %v681 = vadd.f32 %v589, %v680
      %682 = vmatmul.bf16.gmra.mxu0 %v559
      %v683 = vpop.f32.mrf.mxu0
      %v684 = vadd.f32 %v589, %v683
      %v685 = vpop.f32.mrf.mxu0
      %v686 = vadd.f32 %v589, %v685
      %687 = vmatmul.bf16.gmra.mxu0 %v560
      %v688 = vpop.f32.mrf.mxu0
      %v689 = vadd.f32 %v589, %v688
      %v690 = vpop.f32.mrf.mxu0
      %v691 = vadd.f32 %v589, %v690
      %692 = vmatmul.bf16.gmra.mxu0 %v561
      %v693 = vpop.f32.mrf.mxu0
      %v694 = vadd.f32 %v589, %v693
      %v695 = vpop.f32.mrf.mxu0
      %v696 = vadd.f32 %v589, %v695
      %697 = vmatmul.bf16.gmra.mxu0 %v562
      %v698 = vpop.f32.mrf.mxu0
      %v699 = vadd.f32 %v589, %v698
      %v700 = vpop.f32.mrf.mxu0
      %v701 = vadd.f32 %v589, %v700
      %702 = vmatmul.bf16.gmra.mxu0 %v563
      %v703 = vpop.f32.mrf.mxu0
      %v704 = vadd.f32 %v589, %v703
      %v705 = vpop.f32.mrf.mxu0
      %v706 = vadd.f32 %v589, %v705
      %707 = vmatmul.bf16.gmra.mxu0 %v564
      %v708 = vpop.f32.mrf.mxu0
      %v709 = vadd.f32 %v589, %v708
      %v710 = vpop.f32.mrf.mxu0
      %v711 = vadd.f32 %v589, %v710
      %712 = vmatmul.bf16.gmra.mxu0 %v565
      %v713 = vpop.f32.mrf.mxu0
      %v714 = vadd.f32 %v589, %v713
      %v715 = vpop.f32.mrf.mxu0
      %v716 = vadd.f32 %v589, %v715
      %717 = vmatmul.bf16.gmra.mxu0 %v566
      %v718 = vpop.f32.mrf.mxu0
      %v719 = vadd.f32 %v589, %v718
      %v720 = vpop.f32.mrf.mxu0
      %v721 = vadd.f32 %v589, %v720
      %722 = vmatmul.bf16.gmra.mxu0 %v567
      %v723 = vpop.f32.mrf.mxu0
      %v724 = vadd.f32 %v589, %v723
      %v725 = vpop.f32.mrf.mxu0
      %v726 = vadd.f32 %v589, %v725
      %727 = vmatmul.bf16.gmra.mxu0 %v568
      %v728 = vpop.f32.mrf.mxu0
      %v729 = vadd.f32 %v589, %v728
      %v730 = vpop.f32.mrf.mxu0
      %v731 = vadd.f32 %v589, %v730
      %732 = vmatmul.bf16.gmra.mxu0 %v569
      %v733 = vpop.f32.mrf.mxu0
      %v734 = vadd.f32 %v589, %v733
      %v735 = vpop.f32.mrf.mxu0
      %v736 = vadd.f32 %v589, %v735
      %737 = vmatmul.bf16.gmra.mxu0 %v570
      %v738 = vpop.f32.mrf.mxu0
      %v739 = vadd.f32 %v589, %v738
      %v740 = vpop.f32.mrf.mxu0
      %v741 = vadd.f32 %v589, %v740
      %742 = vdwg.mxu0
      %v743 = vmax.f32 %v649, 0.0
      %v744 = vmax.f32 %v651, 0.0
      %v745 = vmax.f32 %v654, 0.0
      %v746 = vmax.f32 %v656, 0.0
      %v747 = vmax.f32 %v659, 0.0
      %v748 = vmax.f32 %v661, 0.0
      %v749 = vmax.f32 %v664, 0.0
      %v750 = vmax.f32 %v666, 0.0
      %v751 = vmax.f32 %v669, 0.0
      %v752 = vmax.f32 %v671, 0.0
      %v753 = vmax.f32 %v674, 0.0
      %v754 = vmax.f32 %v676, 0.0
      %v755 = vmax.f32 %v679, 0.0
      %v756 = vmax.f32 %v681, 0.0
      %v757 = vmax.f32 %v684, 0.0
      %v758 = vmax.f32 %v686, 0.0
      %v759 = vmax.f32 %v689, 0.0
      %v760 = vmax.f32 %v691, 0.0
      %v761 = vmax.f32 %v694, 0.0
      %v762 = vmax.f32 %v696, 0.0
      %v763 = vmax.f32 %v699, 0.0
      %v764 = vmax.f32 %v701, 0.0
      %v765 = vmax.f32 %v704, 0.0
      %v766 = vmax.f32 %v706, 0.0
      %v767 = vmax.f32 %v709, 0.0
      %v768 = vmax.f32 %v711, 0.0
      %v769 = vmax.f32 %v714, 0.0
      %v770 = vmax.f32 %v716, 0.0
      %v771 = vmax.f32 %v719, 0.0
      %v772 = vmax.f32 %v721, 0.0
      %v773 = vmax.f32 %v724, 0.0
      %v774 = vmax.f32 %v726, 0.0
      %v775 = vmax.f32 %v729, 0.0
      %v776 = vmax.f32 %v731, 0.0
      %v777 = vmax.f32 %v734, 0.0
      %v778 = vmax.f32 %v736, 0.0
      %v779 = vmax.f32 %v739, 0.0
      %v780 = vmax.f32 %v741, 0.0
      %v781 = vpack.c.bf16 %v744, %v743
      %v782 = vpack.c.bf16 %v746, %v745
      %v783 = vpack.c.bf16 %v748, %v747
      %v784 = vpack.c.bf16 %v750, %v749
      %v785 = vpack.c.bf16 %v752, %v751
      %v786 = vpack.c.bf16 %v754, %v753
      %v787 = vpack.c.bf16 %v756, %v755
      %v788 = vpack.c.bf16 %v758, %v757
      %v789 = vpack.c.bf16 %v760, %v759
      %v790 = vpack.c.bf16 %v762, %v761
      %v791 = vpack.c.bf16 %v764, %v763
      %v792 = vpack.c.bf16 %v766, %v765
      %v793 = vpack.c.bf16 %v768, %v767
      %v794 = vpack.c.bf16 %v770, %v769
      %v795 = vpack.c.bf16 %v772, %v771
      %v796 = vpack.c.bf16 %v774, %v773
      %v797 = vpack.c.bf16 %v776, %v775
      %v798 = vpack.c.bf16 %v778, %v777
      %v799 = vpack.c.bf16 %v780, %v779
      %v800 = vld [vmem:[%s5] sm:$0xf]
      %v801 = vld [vmem:[%s5 + $0x4] sm:$0xf]
      %v802 = vld [vmem:[%s5 + $0x8] sm:$0xf]
      %v803 = vld [vmem:[%s5 + $0xc] sm:$0xf]
      %v804 = vld [vmem:[%s5 + $0x10] sm:$0xf]
      %v805 = vld [vmem:[%s5 + $0x14] sm:$0xf]
      %v806 = vld [vmem:[%s5 + $0x18] sm:$0xf]
      %v807 = vld [vmem:[%s5 + $0x1c] sm:$0xf]
      %v808 = vld [vmem:[%s5 + $0x20] sm:$0xf]
      %v809 = vld [vmem:[%s5 + $0x24] sm:$0xf]
      %v810 = vld [vmem:[%s5 + $0x28] sm:$0xf]
      %v811 = vld [vmem:[%s5 + $0x2c] sm:$0xf]
      %v812 = vld [vmem:[%s5 + $0x30] sm:$0xf]
      %v813 = vld [vmem:[%s5 + $0x34] sm:$0xf]
      %v814 = vld [vmem:[%s5 + $0x38] sm:$0xf]
      %v815 = vld [vmem:[%s5 + $0x3c] sm:$0xf]
      %v816 = vld [vmem:[%s6] sm:$0x1]
      %v818 = vperm.slane %v816, 0
      %v836 = vunpack.c.l.b16 %v800
      %v837 = vunpack.c.l.b16 %v801
      %v838 = vunpack.c.l.b16 %v802
      %v839 = vunpack.c.l.b16 %v803
      %v840 = vunpack.c.l.b16 %v804
      %v841 = vunpack.c.l.b16 %v805
      %v842 = vunpack.c.l.b16 %v806
      %v843 = vunpack.c.l.b16 %v807
      %v844 = vunpack.c.l.b16 %v808
      %v845 = vunpack.c.l.b16 %v809
      %v846 = vunpack.c.l.b16 %v810
      %v847 = vunpack.c.l.b16 %v811
      %v848 = vunpack.c.l.b16 %v812
      %v849 = vunpack.c.l.b16 %v813
      %v850 = vunpack.c.l.b16 %v814
      %v851 = vunpack.c.l.b16 %v815
      %v852 = vpack.c.b16 %v837, %v836
      %v853 = vpack.c.b16 %v839, %v838
      %v854 = vpack.c.b16 %v841, %v840
      %v855 = vpack.c.b16 %v843, %v842
      %v856 = vpack.c.b16 %v845, %v844
      %v857 = vpack.c.b16 %v847, %v846
      %v858 = vpack.c.b16 %v849, %v848
      %v859 = vpack.c.b16 %v851, %v850
      %868 = vmatpush.bf16.msra.mxu0 %v859
      %869 = vmatpush.bf16.msra.mxu0 %v858
      %870 = vmatpush.bf16.msra.mxu0 %v857
      %871 = vmatpush.bf16.msra.mxu0 %v856
      %872 = vmatpush.bf16.msra.mxu0 %v855
      %873 = vmatpush.bf16.msra.mxu0 %v854
      %874 = vmatpush.bf16.msra.mxu0 %v853
      %875 = vmatpush.bf16.msra.mxu0 %v852
      %876 = vmatmul.bf16.gmra.mxu0 %v781
      %v877 = vpop.f32.mrf.mxu0
      %v878 = vadd.f32 %v818, %v877
      %v879 = vpop.f32.mrf.mxu0
      %v880 = vadd.f32 %v818, %v879
      %881 = vmatmul.bf16.gmra.mxu0 %v782
      %v882 = vpop.f32.mrf.mxu0
      %v883 = vadd.f32 %v818, %v882
      %v884 = vpop.f32.mrf.mxu0
      %v885 = vadd.f32 %v818, %v884
      %886 = vmatmul.bf16.gmra.mxu0 %v783
      %v887 = vpop.f32.mrf.mxu0
      %v888 = vadd.f32 %v818, %v887
      %v889 = vpop.f32.mrf.mxu0
      %v890 = vadd.f32 %v818, %v889
      %891 = vmatmul.bf16.gmra.mxu0 %v784
      %v892 = vpop.f32.mrf.mxu0
      %v893 = vadd.f32 %v818, %v892
      %v894 = vpop.f32.mrf.mxu0
      %v895 = vadd.f32 %v818, %v894
      %896 = vmatmul.bf16.gmra.mxu0 %v785
      %v897 = vpop.f32.mrf.mxu0
      %v898 = vadd.f32 %v818, %v897
      %v899 = vpop.f32.mrf.mxu0
      %v900 = vadd.f32 %v818, %v899
      %901 = vmatmul.bf16.gmra.mxu0 %v786
      %v902 = vpop.f32.mrf.mxu0
      %v903 = vadd.f32 %v818, %v902
      %v904 = vpop.f32.mrf.mxu0
      %v905 = vadd.f32 %v818, %v904
      %906 = vmatmul.bf16.gmra.mxu0 %v787
      %v907 = vpop.f32.mrf.mxu0
      %v908 = vadd.f32 %v818, %v907
      %v909 = vpop.f32.mrf.mxu0
      %v910 = vadd.f32 %v818, %v909
      %911 = vmatmul.bf16.gmra.mxu0 %v788
      %v912 = vpop.f32.mrf.mxu0
      %v913 = vadd.f32 %v818, %v912
      %v914 = vpop.f32.mrf.mxu0
      %v915 = vadd.f32 %v818, %v914
      %916 = vmatmul.bf16.gmra.mxu0 %v789
      %v917 = vpop.f32.mrf.mxu0
      %v918 = vadd.f32 %v818, %v917
      %v919 = vpop.f32.mrf.mxu0
      %v920 = vadd.f32 %v818, %v919
      %921 = vmatmul.bf16.gmra.mxu0 %v790
      %v922 = vpop.f32.mrf.mxu0
      %v923 = vadd.f32 %v818, %v922
      %v924 = vpop.f32.mrf.mxu0
      %v925 = vadd.f32 %v818, %v924
      %926 = vmatmul.bf16.gmra.mxu0 %v791
      %v927 = vpop.f32.mrf.mxu0
      %v928 = vadd.f32 %v818, %v927
      %v929 = vpop.f32.mrf.mxu0
      %v930 = vadd.f32 %v818, %v929
      %931 = vmatmul.bf16.gmra.mxu0 %v792
      %v932 = vpop.f32.mrf.mxu0
      %v933 = vadd.f32 %v818, %v932
      %v934 = vpop.f32.mrf.mxu0
      %v935 = vadd.f32 %v818, %v934
      %936 = vmatmul.bf16.gmra.mxu0 %v793
      %v937 = vpop.f32.mrf.mxu0
      %v938 = vadd.f32 %v818, %v937
      %v939 = vpop.f32.mrf.mxu0
      %v940 = vadd.f32 %v818, %v939
      %941 = vmatmul.bf16.gmra.mxu0 %v794
      %v942 = vpop.f32.mrf.mxu0
      %v943 = vadd.f32 %v818, %v942
      %v944 = vpop.f32.mrf.mxu0
      %v945 = vadd.f32 %v818, %v944
      %946 = vmatmul.bf16.gmra.mxu0 %v795
      %v947 = vpop.f32.mrf.mxu0
      %v948 = vadd.f32 %v818, %v947
      %v949 = vpop.f32.mrf.mxu0
      %v950 = vadd.f32 %v818, %v949
      %951 = vmatmul.bf16.gmra.mxu0 %v796
      %v952 = vpop.f32.mrf.mxu0
      %v953 = vadd.f32 %v818, %v952
      %v954 = vpop.f32.mrf.mxu0
      %v955 = vadd.f32 %v818, %v954
      %956 = vmatmul.bf16.gmra.mxu0 %v797
      %v957 = vpop.f32.mrf.mxu0
      %v958 = vadd.f32 %v818, %v957
      %v959 = vpop.f32.mrf.mxu0
      %v960 = vadd.f32 %v818, %v959
      %961 = vmatmul.bf16.gmra.mxu0 %v798
      %v962 = vpop.f32.mrf.mxu0
      %v963 = vadd.f32 %v818, %v962
      %v964 = vpop.f32.mrf.mxu0
      %v965 = vadd.f32 %v818, %v964
      %966 = vmatmul.bf16.gmra.mxu0 %v799
      %v967 = vpop.f32.mrf.mxu0
      %v968 = vadd.f32 %v818, %v967
      %v969 = vpop.f32.mrf.mxu0
      %v970 = vadd.f32 %v818, %v969
      %971 = vdwg.mxu0
      %vm972 = vcmask 64512
      %973 = vst.msk [vmem:[%s280] sm:$0xff] %vm972, %v878
      %974 = vst.msk [vmem:[%s280 + $0x8] sm:$0xff] %vm972, %v880
      %975 = vst.msk [vmem:[%s280 + $0x10] sm:$0xff] %vm972, %v883
      %976 = vst.msk [vmem:[%s280 + $0x18] sm:$0xff] %vm972, %v885
      %977 = vst.msk [vmem:[%s280 + $0x20] sm:$0xff] %vm972, %v888
      %978 = vst.msk [vmem:[%s280 + $0x28] sm:$0xff] %vm972, %v890
      %979 = vst.msk [vmem:[%s280 + $0x30] sm:$0xff] %vm972, %v893
      %980 = vst.msk [vmem:[%s280 + $0x38] sm:$0xff] %vm972, %v895
      %981 = vst.msk [vmem:[%s280 + $0x40] sm:$0xff] %vm972, %v898
      %982 = vst.msk [vmem:[%s280 + $0x48] sm:$0xff] %vm972, %v900
      %983 = vst.msk [vmem:[%s280 + $0x50] sm:$0xff] %vm972, %v903
      %984 = vst.msk [vmem:[%s280 + $0x58] sm:$0xff] %vm972, %v905
      %985 = vst.msk [vmem:[%s280 + $0x60] sm:$0xff] %vm972, %v908
      %986 = vst.msk [vmem:[%s280 + $0x68] sm:$0xff] %vm972, %v910
      %987 = vst.msk [vmem:[%s280 + $0x70] sm:$0xff] %vm972, %v913
      %988 = vst.msk [vmem:[%s280 + $0x78] sm:$0xff] %vm972, %v915
      %989 = vst.msk [vmem:[%s280 + $0x80] sm:$0xff] %vm972, %v918
      %990 = vst.msk [vmem:[%s280 + $0x88] sm:$0xff] %vm972, %v920
      %991 = vst.msk [vmem:[%s280 + $0x90] sm:$0xff] %vm972, %v923
      %992 = vst.msk [vmem:[%s280 + $0x98] sm:$0xff] %vm972, %v925
      %993 = vst.msk [vmem:[%s280 + $0xa0] sm:$0xff] %vm972, %v928
      %994 = vst.msk [vmem:[%s280 + $0xa8] sm:$0xff] %vm972, %v930
      %995 = vst.msk [vmem:[%s280 + $0xb0] sm:$0xff] %vm972, %v933
      %996 = vst.msk [vmem:[%s280 + $0xb8] sm:$0xff] %vm972, %v935
      %997 = vst.msk [vmem:[%s280 + $0xc0] sm:$0xff] %vm972, %v938
      %998 = vst.msk [vmem:[%s280 + $0xc8] sm:$0xff] %vm972, %v940
      %999 = vst.msk [vmem:[%s280 + $0xd0] sm:$0xff] %vm972, %v943
      %1000 = vst.msk [vmem:[%s280 + $0xd8] sm:$0xff] %vm972, %v945
      %1001 = vst.msk [vmem:[%s280 + $0xe0] sm:$0xff] %vm972, %v948
      %1002 = vst.msk [vmem:[%s280 + $0xe8] sm:$0xff] %vm972, %v950
      %1003 = vst.msk [vmem:[%s280 + $0xf0] sm:$0xff] %vm972, %v953
      %1004 = vst.msk [vmem:[%s280 + $0xf8] sm:$0xff] %vm972, %v955
      %1005 = vst.msk [vmem:[%s280 + $0x100] sm:$0xff] %vm972, %v958
      %1006 = vst.msk [vmem:[%s280 + $0x108] sm:$0xff] %vm972, %v960
      %1007 = vst.msk [vmem:[%s280 + $0x110] sm:$0xff] %vm972, %v963
      %1008 = vst.msk [vmem:[%s280 + $0x118] sm:$0xff] %vm972, %v965
      %1009 = vst.msk [vmem:[%s280 + $0x120] sm:$0xff] %vm972, %v968
      %1010 = vst.msk [vmem:[%s280 + $0x128] sm:$0xff] %vm972, %v970
      %s1011 = smul.u32 38, %s18
      %p1012 = scmp.lt.s32.totalorder %s1011, 75
      %s1013 = scalar_select %p1012, %s1011, 75
      %s1014 = smul.addr %s1013, 8
      %s1015 = scalar_lea.vmem %s7, %s1014
      // Predicated region
      $region49: #{mlp_forward.1} parent=47 // pred_check
        %p1016 = pneg %p188
      $region50: #{mlp_forward.1} parent=47 // pred_check_branch
        %1018 = sbr.rel (%p1016) target = $region52
      $region51: #{mlp_forward.1} parent=47 // pred_region
        %s1019 = smul.u32 38, %s18
      $region52: #{mlp_forward.1} parent=47 // pred_fallthru
        _
    $region48: #{mlp_forward.1} parent=5 // pred_fallthru
      _
    %p1020 = scmp.le.s32.totalorder 2, %s13
    // Predicated region
    $region53: #{mlp_forward.1} parent=5 // pred_check
      %p1021 = pneg %p1020
    $region54: #{mlp_forward.1} parent=5 // pred_check_branch
      %1023 = sbr.rel (%p1021) target = $region56
    $region55: #{mlp_forward.1} parent=5 // pred_region
      %s1024 = ssub.s32 %s13, 2
      // Predicated region
      $region57: #{mlp_forward.1} parent=55 // pred_check
        %p1025 = pneg %p194
      $region58: #{mlp_forward.1} parent=55 // pred_check_branch
        %1027 = sbr.rel (%p1025) target = $region60
      $region59: #{mlp_forward.1} parent=55 // pred_region
        %s1028 = smul.u32 38, %s19
        %p1029 = scmp.lt.s32.totalorder %s1028, 75
        %s1030 = scalar_select %p1029, %s1028, 75
        %s1031 = smul.addr %s1030, 8
        %s1032 = scalar_lea.vmem %s7, %s1031
      $region60: #{mlp_forward.1} parent=55 // pred_fallthru
        _
    $region56: #{mlp_forward.1} parent=5 // pred_fallthru
      _
  $region6: #{mlp_forward.1} parent=0 // loop_footer
    %s17 = sadd.s32 1, %s13
  $region7: #{mlp_forward.1} parent=0 // loop_footer_branch
    %12 = sbr.rel target = $region3
  $region8: #{mlp_forward.1} parent=0 // loop_exit
    _

</llo_original>
